<compile_context>
chip_gen: v5e
topology: v5e:2x2
jax: 0.10.0
libtpu: 0.0.40
codegen_flags: <defaults>
</compile_context>

<pallas_src>
import jax
import jax.numpy as jnp
from jax import lax
from jax.experimental import pallas as pl
from jax.experimental.pallas import tpu as pltpu


def _round_up(x, m):
    return (x + m - 1) // m * m


# ----------------------------------------------------------------------------
# Pallas kernel: fused 1x1-conv detection heads  o = W @ x + b  (MXU matmul)
# ----------------------------------------------------------------------------
def _fused_head_kernel(head_id_ref, x_ref, w_ref, b_ref, o_ref):
    # head_id_ref: SMEM (n_steps,) int32 — consumed only by the index_maps.
    # x_ref: (Cmax,  TS)   bf16     w_ref: (Cout_p, Cmax) bf16
    # b_ref: (Cout_p, 1)   f32      o_ref: (Cout_p, TS)   f32
    acc = jnp.dot(w_ref[...], x_ref[...], preferred_element_type=jnp.float32)
    o_ref[...] = (acc + b_ref[...]).astype(o_ref.dtype)


def _pick_lane_tile(lane_lens, max_tile=1024, overhead_lanes=256):
    """Lane tile (multiple of 128) balancing per-grid-step overhead (~0.35us,
    modelled as `overhead_lanes` lanes of traffic) against the lane padding
    needed so every tile is completely full (no masked partial stores)."""
    best_ts, best_cost = 128, None
    for ts in range(128, max_tile + 1, 128):
        padded = sum(_round_up(l, ts) for l in lane_lens)
        cost = padded + (padded // ts) * overhead_lanes
        if best_cost is None or cost <= best_cost:   # ties -> larger tile
            best_ts, best_cost = ts, cost
    return best_ts


def fused_conv1x1_heads(feats, weights, biases, *,
                        compute_dtype=jnp.bfloat16, max_tile=1024):
    """Fused pointwise Conv2d-with-bias heads, NCHW in / NCHW out.

    feats[i]:   (N, Cin_i, H_i, W_i)
    weights[i]: (Cout, Cin_i)   (PyTorch (Cout, Cin, 1, 1) squeezed)
    biases[i]:  (Cout,)
    Returns a tuple of (N, Cout, H_i, W_i) arrays in the input dtype.
    On v7x, `max_tile` can be raised to 2048-4096 for large feature maps.
    """
    out_dtype = feats[0].dtype
    Cout = weights[0].shape[0]
    cin = [w.shape[1] for w in weights]

    pack = 16 if jnp.dtype(compute_dtype).itemsize == 2 else 8
    Cmax = _round_up(max(cin), pack)          # common (padded) contraction dim
    Cout_p = _round_up(Cout, 8)               # sublane-aligned f32 output rows

    # Lane length per head: batch is folded into the lane axis so that stores
    # stay lane-dense even for tiny feature maps.
    L = [f.shape[0] * f.shape[2] * f.shape[3] for f in feats]
    TS = _pick_lane_tile(L, max_tile=max_tile)
    Lp = [_round_up(l, TS) for l in L]        # whole number of full tiles
    L_total = sum(Lp)
    n_steps = L_total // TS

    # (N, Cin, H, W) -> (Cin, N*H*W), cast to bf16, zero-pad channels & lanes,
    # concatenate all heads along the lane axis.
    x_parts = []
    for f, c, l, lp in zip(feats, cin, L, Lp):
        n, _, h, w = f.shape
        x2 = jnp.transpose(f.reshape(n, c, h * w), (1, 0, 2)).reshape(c, l)
        x2 = jnp.pad(x2.astype(compute_dtype), ((0, Cmax - c), (0, lp - l)))
        x_parts.append(x2)
    x_all = jnp.concatenate(x_parts, axis=1)                 # (Cmax, L_total)

    w_stack = jnp.stack([
        jnp.pad(w.astype(compute_dtype),
                ((0, Cout_p - Cout), (0, Cmax - w.shape[1])))
        for w in weights])                                   # (H, Cout_p, Cmax)
    b_stack = jnp.stack([
        jnp.pad(b.astype(jnp.float32), (0, Cout_p - Cout)).reshape(Cout_p, 1)
        for b in biases])                                    # (H, Cout_p, 1)

    # Static per-grid-step head id, scalar-prefetched into SMEM; it drives the
    # weight/bias index_maps.  The lane-block offset is simply the step index,
    # so the output index_map stays data-independent (safe for "parallel").
    head_ids = []
    for i, lp in enumerate(Lp):
        head_ids += [i] * (lp // TS)
    head_ids = jnp.asarray(head_ids, jnp.int32)

    out_all = pl.pallas_call(
        _fused_head_kernel,
        out_shape=jax.ShapeDtypeStruct((Cout_p, L_total), out_dtype),
        grid_spec=pltpu.PrefetchScalarGridSpec(
            num_scalar_prefetch=1,
            grid=(n_steps,),
            in_specs=[
                # activations: one lane-dense (Cmax, TS) tile per step
                pl.BlockSpec((Cmax, TS), lambda g, hid: (0, g)),
                # stacked weights / bias: selected by the prefetched head id;
                # constant within a head -> stays resident in VMEM
                pl.BlockSpec((None, Cout_p, Cmax), lambda g, hid: (hid[g], 0, 0)),
                pl.BlockSpec((None, Cout_p, 1), lambda g, hid: (hid[g], 0, 0)),
            ],
            out_specs=pl.BlockSpec((Cout_p, TS), lambda g, hid: (0, g)),
        ),
        compiler_params=pltpu.CompilerParams(
            dimension_semantics=("parallel",),    # distinct output tile/step
            vmem_limit_bytes=32 * 1024 * 1024,    # safe on v5e/v6e/v7x
        ),
    )(head_ids, x_all, w_stack, b_stack)

    # Undo padding + lane fold: (Cout_p, L_total) -> per-head (N, Cout, H, W).
    outs, off = [], 0
    for f, l, lp in zip(feats, L, Lp):
        n, _, h, w = f.shape
        o = out_all[:Cout, off:off + l].reshape(Cout, n, h, w)
        outs.append(jnp.transpose(o, (1, 0, 2, 3)))
        off += lp
    return tuple(outs)


# ----------------------------------------------------------------------------
# Synthetic backbone stub.  The real YOLOv5s backbone_head is an external,
# pretrained module that is NOT defined in the reference snippet; it produces
# three multi-scale feature maps with channels ch[0..2] at strides 8/16/32.
# TODO(synk): YOLO.backbone_head (CSPDarknet + PANet) is an external module;
#             replaced here with a deterministic strided-conv stand-in.
# ----------------------------------------------------------------------------
def _conv2d_nchw(x, w, b, stride):
    y = lax.conv_general_dilated(
        x, w,
        window_strides=(stride, stride),
        padding="SAME",
        dimension_numbers=("NCHW", "OIHW", "NCHW"),
    )
    return jax.nn.relu(y + b.reshape(1, -1, 1, 1))


def make_backbone_params(key, in_ch, ch):
    params = []
    prev = in_ch
    for c in (ch[0], ch[0], ch[0], ch[0], ch[1], ch[2]):
        k1, k2, key = jax.random.split(key, 3)
        w = jax.random.normal(k1, (c, prev, 3, 3), jnp.float32) * 0.05
        b = jax.random.normal(k2, (c,), jnp.float32) * 0.01
        params.append((w, b))
        prev = c
    return params


def backbone_stub(x, params):
    # strides: 2,2,2 -> /8 (out0) ; 2 -> /16 (out1) ; 2 -> /32 (out2)
    h = x
    for p in params[:3]:
        h = _conv2d_nchw(h, *p, stride=2)
    h = _conv2d_nchw(h, *params[3], stride=1)
    out0 = h                                         # (N, ch[0], H/8,  W/8)
    out1 = _conv2d_nchw(out0, *params[4], 2)         # (N, ch[1], H/16, W/16)
    out2 = _conv2d_nchw(out1, *params[5], 2)         # (N, ch[2], H/32, W/32)
    return out0, out1, out2


# ----------------------------------------------------------------------------
# My_YOLOv5s_extract forward
# ----------------------------------------------------------------------------
class MyYOLOv5sExtract:
    def __init__(self, key, in_ch, ch, num_classes, anchors):
        self.ch = ch
        self.no = num_classes + 5
        self.na = len(anchors[0]) // 2
        cout = self.no * self.na

        kb, k0, k1, k2, kb0, kb1, kb2 = jax.random.split(key, 7)
        self.backbone_params = make_backbone_params(kb, in_ch, ch)
        # nn.Conv2d(ch[i], no*na, 1): (Cout, Cin, 1, 1) stored as (Cout, Cin)
        self.w0 = jax.random.normal(k0, (cout, ch[0]), jnp.float32) * 0.05
        self.w1 = jax.random.normal(k1, (cout, ch[1]), jnp.float32) * 0.05
        self.w2 = jax.random.normal(k2, (cout, ch[2]), jnp.float32) * 0.05
        self.b0 = jax.random.normal(kb0, (cout,), jnp.float32) * 0.1
        self.b1 = jax.random.normal(kb1, (cout,), jnp.float32) * 0.1
        self.b2 = jax.random.normal(kb2, (cout,), jnp.float32) * 0.1

    def __call__(self, x):
        out0, out1, out2 = backbone_stub(x, self.backbone_params)
        # All three detection heads in ONE fused Pallas call (bf16 traffic,
        # f32 accumulate + f32 bias, f32 output).
        return fused_conv1x1_heads(
            (out0, out1, out2),
            (self.w0, self.w1, self.w2),
            (self.b0, self.b1, self.b2))


if __name__ == "__main__":
    key = jax.random.PRNGKey(0)
    k_param, k_x = jax.random.split(key)

    # Small, forward-consistent shapes.
    num_classes = 3
    anchors = ((10, 13, 16, 30, 33, 23),
               (30, 61, 62, 45, 59, 119),
               (116, 90, 156, 198, 373, 326))   # na = 3, no = 8 -> Cout = 24
    ch = (32, 48, 64)
    N, C_in, H, W = 2, 3, 64, 64

    model = MyYOLOv5sExtract(k_param, C_in, ch, num_classes, anchors)
    x = jax.random.normal(k_x, (N, C_in, H, W), jnp.float32)

    forward = jax.jit(model.__call__)
    out0, out1, out2 = forward(x)
    jax.block_until_ready((out0, out1, out2))

    cout = (num_classes + 5) * 3
    assert out0.shape == (N, cout, H // 8, W // 8), out0.shape
    assert out1.shape == (N, cout, H // 16, W // 16), out1.shape
    assert out2.shape == (N, cout, H // 32, W // 32), out2.shape

    # Reference applies the same bf16 quantization of x/W as the kernel
    # (f32 accumulate), so the comparison is tight and deterministic.
    def ref_head(f, w, b):
        fq = f.astype(jnp.bfloat16).astype(jnp.float32)
        wq = w.astype(jnp.bfloat16).astype(jnp.float32)
        y = jnp.einsum("nchw,oc->nohw", fq, wq,
                       precision=lax.Precision.HIGHEST)
        return y + b.reshape(1, -1, 1, 1)

    f0, f1, f2 = backbone_stub(x, model.backbone_params)
    for got, f, w_, b_ in ((out0, f0, model.w0, model.b0),
                           (out1, f1, model.w1, model.b1),
                           (out2, f2, model.w2, model.b2)):
        ref = ref_head(f, w_, b_)
        assert jnp.allclose(got, ref, atol=5e-3, rtol=5e-3)

    # Extra check: ragged shapes exercising Cin/Cout/lane padding and multiple
    # lane tiles per head inside the single fused call.
    ks = jax.random.split(jax.random.PRNGKey(1), 9)
    cout2 = 20
    shapes = ((1, 40, 12, 50), (1, 24, 6, 25), (1, 56, 3, 13))
    feats2 = [jax.random.normal(k, s, jnp.float32) * 0.5
              for k, s in zip(ks[:3], shapes)]
    ws2 = [jax.random.normal(k, (cout2, s[1]), jnp.float32) * 0.05
           for k, s in zip(ks[3:6], shapes)]
    bs2 = [jax.random.normal(k, (cout2,), jnp.float32) * 0.1 for k in ks[6:9]]
    got2 = fused_conv1x1_heads(feats2, ws2, bs2)
    jax.block_until_ready(got2)
    for got, f, w_, b_ in zip(got2, feats2, ws2, bs2):
        assert jnp.allclose(got, ref_head(f, w_, b_), atol=5e-3, rtol=5e-3)

    print("KERNEL_OK")
</pallas_src>

<mosaic_0001>
module attributes {stable_mosaic.version = 11 : i64} {
  func.func @_fused_head_kernel(%arg0: i32, %arg1: memref<3xi32, #tpu.memory_space<smem>>, %arg2: memref<64x128xbf16, #tpu.memory_space<vmem>>, %arg3: memref<1x24x64xbf16, #tpu.memory_space<vmem>>, %arg4: memref<1x24x1xf32, #tpu.memory_space<vmem>>, %arg5: memref<24x128xf32, #tpu.memory_space<vmem>>) attributes {dimension_semantics = [#tpu.dimension_semantics<parallel>], iteration_bounds = array<i64: 3>, scalar_prefetch = 1 : i64, scratch_operands = 0 : i64, tpu.core_type = #tpu.core_type<tc>, window_params = [{transform_indices = @transform_0, window_bounds = array<i64: 64, 128>}, {transform_indices = @transform_1, window_bounds = array<i64: 1, 24, 64>}, {transform_indices = @transform_2, window_bounds = array<i64: 1, 24, 1>}, {transform_indices = @transform_3, window_bounds = array<i64: 24, 128>}]} {
    %c0 = arith.constant 0 : index
    %c0_0 = arith.constant 0 : index
    %c0_1 = arith.constant 0 : index
    %0 = vector.load %arg3[%c0, %c0_0, %c0_1] : memref<1x24x64xbf16, #tpu.memory_space<vmem>>, vector<1x24x64xbf16>
    %1 = vector.shape_cast %0 : vector<1x24x64xbf16> to vector<24x64xbf16>
    %c0_2 = arith.constant 0 : index
    %c0_3 = arith.constant 0 : index
    %2 = vector.load %arg2[%c0_2, %c0_3] : memref<64x128xbf16, #tpu.memory_space<vmem>>, vector<64x128xbf16>
    %cst = arith.constant dense<0.000000e+00> : vector<24x128xf32>
    %3 = tpu.matmul %1, %2, %cst {dimension_numbers = #tpu.dot_dimension_numbers<[1], [0], [0], [1], [0, 0, 1, 1], [], []>} : vector<24x64xbf16>, vector<64x128xbf16>, vector<24x128xf32> -> vector<24x128xf32>
    %c0_4 = arith.constant 0 : index
    %c0_5 = arith.constant 0 : index
    %c0_6 = arith.constant 0 : index
    %4 = vector.load %arg4[%c0_4, %c0_5, %c0_6] : memref<1x24x1xf32, #tpu.memory_space<vmem>>, vector<1x24x1xf32>
    %5 = vector.shape_cast %4 : vector<1x24x1xf32> to vector<24x1xf32>
    %6 = vector.broadcast %5 : vector<24x1xf32> to vector<24x128xf32>
    %7 = arith.addf %3, %6 : vector<24x128xf32>
    %c0_7 = arith.constant 0 : index
    %c0_8 = arith.constant 0 : index
    %8 = vector.load %arg5[%c0_7, %c0_8] : memref<24x128xf32, #tpu.memory_space<vmem>>, vector<24x128xf32>
    tpu.vector_store %arg5[%c0_7, %c0_8], %7 {strides = array<i32>} : memref<24x128xf32, #tpu.memory_space<vmem>>, vector<24x128xf32>,
    return
  }
  func.func @transform_0(%arg0: i32, %arg1: memref<3xi32, #tpu.memory_space<smem>>) -> (i32, i32) {
    %c0_i32 = arith.constant 0 : i32
    %c0_i32_0 = arith.constant 0 : i32
    return %c0_i32, %arg0 : i32, i32
  }
  func.func @transform_1(%arg0: i32, %arg1: memref<3xi32, #tpu.memory_space<smem>>) -> (i32, i32, i32) {
    %0 = arith.index_cast %arg0 : i32 to index
    %1 = memref.load %arg1[%0] : memref<3xi32, #tpu.memory_space<smem>>
    %c0_i32 = arith.constant 0 : i32
    %c0_i32_0 = arith.constant 0 : i32
    %c0_i32_1 = arith.constant 0 : i32
    return %1, %c0_i32, %c0_i32_0 : i32, i32, i32
  }
  func.func @transform_2(%arg0: i32, %arg1: memref<3xi32, #tpu.memory_space<smem>>) -> (i32, i32, i32) {
    %0 = arith.index_cast %arg0 : i32 to index
    %1 = memref.load %arg1[%0] : memref<3xi32, #tpu.memory_space<smem>>
    %c0_i32 = arith.constant 0 : i32
    %c0_i32_0 = arith.constant 0 : i32
    %c0_i32_1 = arith.constant 0 : i32
    return %1, %c0_i32, %c0_i32_0 : i32, i32, i32
  }
  func.func @transform_3(%arg0: i32, %arg1: memref<3xi32, #tpu.memory_space<smem>>) -> (i32, i32) {
    %c0_i32 = arith.constant 0 : i32
    %c0_i32_0 = arith.constant 0 : i32
    return %c0_i32, %arg0 : i32, i32
  }
}

</mosaic_0001>

<llo_original>
// kernel: a_call__.1
$region0: #{a_call__.1}
  #allocation0 [shape = 'u32[]', space=smem, size = 0x4, offset = 0x4, fixed_abs, tag = 'smem constant byte address 0x4 - core index']
  #allocation1 [shape = 'u32[72,128]{1,0:T(1,128)}', space=vmem, size = 0x9000, scoped, tag = 'internal scratch']
  #allocation2 [shape = 's32[1]{0}', space=sflag, size = 0x4, scoped, tag = 'scoped memory for a_call__.1']
  #allocation3 [shape = 'u8[512]{0}', space=smem, size = 0x200, scoped, tag = 'prefetched SMEM operand 0']
  %s0 = inlined_call_operand.vmem [shape: s32[3], index: 0, kind: input, shape index: {}]
  %s1 = inlined_call_operand.vmem [shape: bf16[64,384], index: 1, kind: input, shape index: {}]
  %s2 = inlined_call_operand.vmem [shape: bf16[3,24,64], index: 2, kind: input, shape index: {}]
  %s3 = inlined_call_operand.vmem [shape: f32[3,24,1], index: 3, kind: input, shape index: {}]
  %s4 = inlined_call_operand.vmem [shape: f32[24,384], index: 4, kind: output, shape index: {}]
  %s5 = sld [smem:[#allocation0]]
  $region120: #{a_call__.1} parent=0
    _
  %s7 = ssub.s32 1, %s5
  %s8 = scalar_select 0, %s7, %s5
  %s10 = sshll.u32 %s0, 4
  %s11 = int_to_ptr.vmem [resolvable:$true] %s10
  %13 = dma.vmem_to_smem %s11, 16, [#allocation3], [#allocation2]
  %15 = dma.done [#allocation2], 16
  %16 = sfence
  $region1: #{a_call__.1} parent=0
    #allocation4 [shape = 'u8[32768]{0}', space=vmem, size = 0x8000, scoped, tag = 'input window, operand 1']
    #allocation5 [shape = 'u8[24576]{0}', space=vmem, size = 0x6000, scoped, tag = 'output window, operand 0']
    loop: start=0, step=1, limit=5
    $region2: #{a_call__.1} parent=1 // loop_pre_header
      _
    $region3: #{a_call__.1} parent=1 // loop_header
      %s18 = sphi 0, %s22
      %p19 = scmp.ge.s32.totalorder %s18, 5
      %s28 = sphi 0, %s30
      %s31 = sphi 0, %s28
      %s32 = sphi 0, %s31
      %s48 = sphi 0, %s32
      %s56 = sphi 0, %s58
      %s59 = sphi 0, %s56
      %s60 = sphi 0, %s59
      %s76 = sphi 0, %s60
      %s84 = sphi 0, %s86
      %s87 = sphi 0, %s84
      %s88 = sphi 0, %s87
      %s104 = sphi 0, %s88
      %s110 = sphi 0, %s112
      %s113 = sphi 0, %s110
      %s114 = sphi 0, %s113
      %s130 = sphi 0, %s114
    $region4: #{a_call__.1} parent=1 // loop_header_branch
      %21 = sbr.rel (%p19) target = $region8
    $region5: #{a_call__.1} parent=1 // loop_body
      %s23 = ssub.s32 %s18, 1
      %s24 = ssub.s32 %s18, 2
      %s25 = sadd.s32 %s18, 1
      %s26 = ssub.s32 %s18, %s25
      %p27 = scmp.eq.s32.totalorder %s26, 0
      %s29 = sadd.s32 %s28, 1
      %s30 = scalar_select %p27, %s28, %s29
      %p33 = pneg %p27
      %p34 = scmp.eq.s32.totalorder %s18, 2
      %p35 = por %p33, %p34
      %p36 = scmp.ne.s32.totalorder %s28, %s31
      %p37 = scmp.eq.s32.totalorder %s18, 0
      %p38 = por %p36, %p37
      %p39 = scmp.ne.s32.totalorder %s28, %s31
      %p40 = scmp.eq.s32.totalorder %s23, 2
      %p41 = por %p39, %p40
      %p42 = scmp.ne.s32.totalorder %s31, %s32
      %p43 = scmp.eq.s32.totalorder %s23, 0
      %p44 = por %p42, %p43
      %p45 = scmp.ne.s32.totalorder %s31, %s32
      %p46 = scmp.eq.s32.totalorder %s24, 2
      %p47 = por %p45, %p46
      %p49 = scmp.ne.s32.totalorder %s32, %s48
      %p50 = scmp.eq.s32.totalorder %s24, 0
      %p51 = por %p49, %p50
      %s52 = sld [smem:[#allocation3 + %s18]]
      %s53 = sld [smem:[#allocation3 + %s25]]
      %s54 = ssub.s32 %s52, %s53
      %p55 = scmp.eq.s32.totalorder %s54, 0
      %s57 = sadd.s32 %s56, 1
      %s58 = scalar_select %p55, %s56, %s57
      %p61 = pneg %p55
      %p62 = scmp.eq.s32.totalorder %s18, 2
      %p63 = por %p61, %p62
      %p64 = scmp.ne.s32.totalorder %s56, %s59
      %p65 = scmp.eq.s32.totalorder %s18, 0
      %p66 = por %p64, %p65
      %p67 = scmp.ne.s32.totalorder %s56, %s59
      %p68 = scmp.eq.s32.totalorder %s23, 2
      %p69 = por %p67, %p68
      %p70 = scmp.ne.s32.totalorder %s59, %s60
      %p71 = scmp.eq.s32.totalorder %s23, 0
      %p72 = por %p70, %p71
      %p73 = scmp.ne.s32.totalorder %s59, %s60
      %p74 = scmp.eq.s32.totalorder %s24, 2
      %p75 = por %p73, %p74
      %p77 = scmp.ne.s32.totalorder %s60, %s76
      %p78 = scmp.eq.s32.totalorder %s24, 0
      %p79 = por %p77, %p78
      %s80 = sld [smem:[#allocation3 + %s18]]
      %s81 = sld [smem:[#allocation3 + %s25]]
      %s82 = ssub.s32 %s80, %s81
      %p83 = scmp.eq.s32.totalorder %s82, 0
      %s85 = sadd.s32 %s84, 1
      %s86 = scalar_select %p83, %s84, %s85
      %p89 = pneg %p83
      %p90 = scmp.eq.s32.totalorder %s18, 2
      %p91 = por %p89, %p90
      %p92 = scmp.ne.s32.totalorder %s84, %s87
      %p93 = scmp.eq.s32.totalorder %s18, 0
      %p94 = por %p92, %p93
      %p95 = scmp.ne.s32.totalorder %s84, %s87
      %p96 = scmp.eq.s32.totalorder %s23, 2
      %p97 = por %p95, %p96
      %p98 = scmp.ne.s32.totalorder %s87, %s88
      %p99 = scmp.eq.s32.totalorder %s23, 0
      %p100 = por %p98, %p99
      %p101 = scmp.ne.s32.totalorder %s87, %s88
      %p102 = scmp.eq.s32.totalorder %s24, 2
      %p103 = por %p101, %p102
      %p105 = scmp.ne.s32.totalorder %s88, %s104
      %p106 = scmp.eq.s32.totalorder %s24, 0
      %p107 = por %p105, %p106
      %s108 = ssub.s32 %s18, %s25
      %p109 = scmp.eq.s32.totalorder %s108, 0
      %s111 = sadd.s32 %s110, 1
      %s112 = scalar_select %p109, %s110, %s111
      %p115 = pneg %p109
      %p116 = scmp.eq.s32.totalorder %s18, 2
      %p117 = por %p115, %p116
      %p118 = scmp.ne.s32.totalorder %s110, %s113
      %p119 = scmp.eq.s32.totalorder %s18, 0
      %p120 = por %p118, %p119
      %p121 = scmp.ne.s32.totalorder %s110, %s113
      %p122 = scmp.eq.s32.totalorder %s23, 2
      %p123 = por %p121, %p122
      %p124 = scmp.ne.s32.totalorder %s113, %s114
      %p125 = scmp.eq.s32.totalorder %s23, 0
      %p126 = por %p124, %p125
      %p127 = scmp.ne.s32.totalorder %s113, %s114
      %p128 = scmp.eq.s32.totalorder %s24, 2
      %p129 = por %p127, %p128
      %p131 = scmp.ne.s32.totalorder %s114, %s130
      %p132 = scmp.eq.s32.totalorder %s24, 0
      %p133 = por %p131, %p132
      %p134 = scmp.le.s32.totalorder 1, %s18
      %p135 = scmp.lt.s32.totalorder %s18, 4
      %p136 = pnand %p134, %p135
      %p137 = pneg %p136
      // Predicated region
      $region9: #{a_call__.1} parent=5 // pred_check
        _
      $region10: #{a_call__.1} parent=5 // pred_check_branch
        %139 = sbr.rel (%p136) target = $region12
      $region11: #{a_call__.1} parent=5 // pred_region
        %s140 = ssub.s32 %s18, 1
      $region12: #{a_call__.1} parent=5 // pred_fallthru
        _
      %p141 = scmp.lt.s32.totalorder %s18, 3
      // Predicated region
      $region13: #{a_call__.1} parent=5 // pred_check
        %p142 = pneg %p141
      $region14: #{a_call__.1} parent=5 // pred_check_branch
        %144 = sbr.rel (%p142) target = $region16
      $region15: #{a_call__.1} parent=5 // pred_region
        // Predicated region
        $region17: #{a_call__.1} parent=15 // pred_check
          %p145 = pneg %p38
        $region18: #{a_call__.1} parent=15 // pred_check_branch
          %147 = sbr.rel (%p145) target = $region20
        $region19: #{a_call__.1} parent=15 // pred_region
          %s148 = sand.u32 %s28, 1
          %s149 = sand.u32 %s28, 1
          %s150 = smul.addr %s149, 32
          %s151 = scalar_lea.vmem [#allocation4], %s150
          %s152 = smul.addr %s18, 4
          %s153 = scalar_lea.vmem %s1, %s152
          // Predicated region
          $region21: #{a_call__.1} parent=19 // pred_check
            _
          $region22: #{a_call__.1} parent=19 // pred_check_branch
            %155 = sbr.rel (0) target = $region24
          $region23: #{a_call__.1} parent=19 // pred_region
            // Predicated region
            $region25: #{a_call__.1} parent=23 // pred_check
              _
            $region26: #{a_call__.1} parent=23 // pred_check_branch
              %157 = sbr.rel target = $region28
            $region27: #{a_call__.1} parent=23 // pred_region
              // Predicated region
              $region40: #{a_call__.1} parent=27 // pred_check
                _
              $region41: #{a_call__.1} parent=27 // pred_check_branch
                %187 = sbr.rel (0) target = $region43
              $region42: #{a_call__.1} parent=27 // pred_region
                loop: start=0, step=1, limit=1
                $region44: #{a_call__.1} parent=42 // loop_pre_header
                  _
                $region45: #{a_call__.1} parent=42 // loop_header
                  %s189 = sphi 0, %s193
                  %p190 = scmp.ge.s32.totalorder %s189, 1
                  %s194 = sphi %s153, %s153
                  %s195 = sphi %s151, %s151
                $region46: #{a_call__.1} parent=42 // loop_header_branch
                  %192 = sbr.rel (%p190) target = $region50
                $region47: #{a_call__.1} parent=42 // loop_body
                  _
                $region48: #{a_call__.1} parent=42 // loop_footer
                  %s193 = sadd.s32 1, %s189
                $region49: #{a_call__.1} parent=42 // loop_footer_branch
                  %188 = sbr.rel target = $region45
                $region50: #{a_call__.1} parent=42 // loop_exit
                  _
                %s197 = ssub.s32 16, 1
                loop: start=0, step=1, limit=1
                $region51: #{a_call__.1} parent=42 // loop_pre_header
                  _
                $region52: #{a_call__.1} parent=42 // loop_header
                  %s199 = sphi 0, %s203
                  %p200 = scmp.ge.s32.totalorder %s199, 1
                  %s204 = sphi %s153, %s153
                  %s205 = sphi %s151, %s151
                $region53: #{a_call__.1} parent=42 // loop_header_branch
                  %202 = sbr.rel (%p200) target = $region57
                $region54: #{a_call__.1} parent=42 // loop_body
                  %v206 = vld [vmem:[%s204] sm:%s197]
                  %207 = vst [vmem:[%s205] sm:%s197] %v206
                  %v208 = vld [vmem:[%s204 + $0xc] sm:%s197]
                  %209 = vst [vmem:[%s205 + $0x4] sm:%s197] %v208
                  %v210 = vld [vmem:[%s204 + $0x18] sm:%s197]
                  %211 = vst [vmem:[%s205 + $0x8] sm:%s197] %v210
                  %v212 = vld [vmem:[%s204 + $0x24] sm:%s197]
                  %213 = vst [vmem:[%s205 + $0xc] sm:%s197] %v212
                  %v214 = vld [vmem:[%s204 + $0x30] sm:%s197]
                  %215 = vst [vmem:[%s205 + $0x10] sm:%s197] %v214
                  %v216 = vld [vmem:[%s204 + $0x3c] sm:%s197]
                  %217 = vst [vmem:[%s205 + $0x14] sm:%s197] %v216
                  %v218 = vld [vmem:[%s204 + $0x48] sm:%s197]
                  %219 = vst [vmem:[%s205 + $0x18] sm:%s197] %v218
                  %v220 = vld [vmem:[%s204 + $0x54] sm:%s197]
                  %221 = vst [vmem:[%s205 + $0x1c] sm:%s197] %v220
                $region55: #{a_call__.1} parent=42 // loop_footer
                  %s203 = sadd.s32 1, %s199
                $region56: #{a_call__.1} parent=42 // loop_footer_branch
                  %198 = sbr.rel target = $region52
                $region57: #{a_call__.1} parent=42 // loop_exit
                  _
              $region43: #{a_call__.1} parent=27 // pred_fallthru
                _
            $region28: #{a_call__.1} parent=23 // pred_fallthru
              _
            // Predicated region
            $region29: #{a_call__.1} parent=23 // pred_check
              _
            $region30: #{a_call__.1} parent=23 // pred_check_branch
              %159 = sbr.rel (0) target = $region32
            $region31: #{a_call__.1} parent=23 // pred_region
              %s161 = ssub.s32 16, 1
              loop: start=0, step=1, limit=1
              $region33: #{a_call__.1} parent=31 // loop_pre_header
                _
              $region34: #{a_call__.1} parent=31 // loop_header
                %s163 = sphi 0, %s167
                %p164 = scmp.ge.s32.totalorder %s163, 1
                %s168 = sphi %s153, %s153
                %s169 = sphi %s151, %s151
              $region35: #{a_call__.1} parent=31 // loop_header_branch
                %166 = sbr.rel (%p164) target = $region39
              $region36: #{a_call__.1} parent=31 // loop_body
                %v170 = vld [vmem:[%s168] sm:%s161]
                %171 = vst [vmem:[%s169] sm:%s161] %v170
                %v172 = vld [vmem:[%s168 + $0xc] sm:%s161]
                %173 = vst [vmem:[%s169 + $0x4] sm:%s161] %v172
                %v174 = vld [vmem:[%s168 + $0x18] sm:%s161]
                %175 = vst [vmem:[%s169 + $0x8] sm:%s161] %v174
                %v176 = vld [vmem:[%s168 + $0x24] sm:%s161]
                %177 = vst [vmem:[%s169 + $0xc] sm:%s161] %v176
                %v178 = vld [vmem:[%s168 + $0x30] sm:%s161]
                %179 = vst [vmem:[%s169 + $0x10] sm:%s161] %v178
                %v180 = vld [vmem:[%s168 + $0x3c] sm:%s161]
                %181 = vst [vmem:[%s169 + $0x14] sm:%s161] %v180
                %v182 = vld [vmem:[%s168 + $0x48] sm:%s161]
                %183 = vst [vmem:[%s169 + $0x18] sm:%s161] %v182
                %v184 = vld [vmem:[%s168 + $0x54] sm:%s161]
                %185 = vst [vmem:[%s169 + $0x1c] sm:%s161] %v184
              $region37: #{a_call__.1} parent=31 // loop_footer
                %s167 = sadd.s32 1, %s163
              $region38: #{a_call__.1} parent=31 // loop_footer_branch
                %162 = sbr.rel target = $region34
              $region39: #{a_call__.1} parent=31 // loop_exit
                _
            $region32: #{a_call__.1} parent=23 // pred_fallthru
              _
          $region24: #{a_call__.1} parent=19 // pred_fallthru
            _
          %222 = vnop
        $region20: #{a_call__.1} parent=15 // pred_fallthru
          _
        // Predicated region
        $region58: #{a_call__.1} parent=15 // pred_check
          %p223 = pneg %p66
        $region59: #{a_call__.1} parent=15 // pred_check_branch
          %225 = sbr.rel (%p223) target = $region61
        $region60: #{a_call__.1} parent=15 // pred_region
          %s226 = sld [smem:[#allocation3 + %s18]]
          %p227 = scmp.lt.s32.totalorder %s226, 2
          %s228 = scalar_select %p227, %s226, 2
          %s229 = smul.addr %s228, 3
          %s230 = smul.addr %s229, 4
          %s231 = scalar_lea.vmem %s2, %s230
          %s232 = sld [smem:[#allocation3 + %s18]]
        $region61: #{a_call__.1} parent=15 // pred_fallthru
          _
        // Predicated region
        $region62: #{a_call__.1} parent=15 // pred_check
          %p233 = pneg %p94
        $region63: #{a_call__.1} parent=15 // pred_check_branch
          %235 = sbr.rel (%p233) target = $region65
        $region64: #{a_call__.1} parent=15 // pred_region
          %s236 = sld [smem:[#allocation3 + %s18]]
          %p237 = scmp.lt.s32.totalorder %s236, 2
          %s238 = scalar_select %p237, %s236, 2
          %s239 = smul.addr %s238, 3
          %s240 = smul.addr %s239, 8
          %s241 = scalar_lea.vmem %s3, %s240
          %s242 = sld [smem:[#allocation3 + %s18]]
        $region65: #{a_call__.1} parent=15 // pred_fallthru
          _
      $region16: #{a_call__.1} parent=5 // pred_fallthru
        _
      %p243 = scmp.le.s32.totalorder 1, %s18
      %p244 = scmp.lt.s32.totalorder %s18, 4
      %p245 = pnand %p243, %p244
      %p246 = pneg %p245
      // Predicated region
      $region66: #{a_call__.1} parent=5 // pred_check
        _
      $region67: #{a_call__.1} parent=5 // pred_check_branch
        %248 = sbr.rel (%p245) target = $region69
      $region68: #{a_call__.1} parent=5 // pred_region
        %s249 = ssub.s32 %s18, 1
        %s250 = sand.u32 %s31, 1
        %s251 = sand.u32 %s31, 1
        %s252 = smul.addr %s251, 32
        %s253 = scalar_lea.vmem [#allocation4], %s252
        // Predicated region
        $region70: #{a_call__.1} parent=68 // pred_check
          %p254 = pneg %p44
        $region71: #{a_call__.1} parent=68 // pred_check_branch
          %256 = sbr.rel (%p254) target = $region73
        $region72: #{a_call__.1} parent=68 // pred_region
          _
        $region73: #{a_call__.1} parent=68 // pred_fallthru
          _
        %s257 = sand.u32 %s31, 1
        %s258 = sand.u32 %s31, 1
        %s259 = smul.addr %s258, 32
        %s260 = scalar_lea.vmem [#allocation4], %s259
        %p261 = pneg %p44
        %p262 = pneg %p41
        %s263 = sld [smem:[#allocation3 + %s23]]
        %p264 = scmp.lt.s32.totalorder %s263, 2
        %s265 = scalar_select %p264, %s263, 2
        %s266 = smul.addr %s265, 3
        %s267 = smul.addr %s266, 4
        %s268 = scalar_lea.vmem %s2, %s267
        %p269 = pneg %p72
        %p270 = pneg %p69
        %s271 = sld [smem:[#allocation3 + %s23]]
        %p272 = scmp.lt.s32.totalorder %s271, 2
        %s273 = scalar_select %p272, %s271, 2
        %s274 = smul.addr %s273, 3
        %s275 = smul.addr %s274, 8
        %s276 = scalar_lea.vmem %s3, %s275
        %p277 = pneg %p100
        %p278 = pneg %p97
        %p279 = pneg %p126
        %p280 = pneg %p123
        %s281 = sand.u32 %s113, 1
        %s282 = sand.u32 %s113, 1
        %s283 = smul.addr %s282, 24
        %s284 = scalar_lea.vmem [#allocation5], %s283
        %s285 = sld [smem:[#allocation3 + %s23]]
        %p286 = scmp.lt.s32.totalorder %s285, 2
        %s287 = scalar_select %p286, %s285, 2
        %s288 = smul.addr %s287, 3
        %s289 = smul.addr %s288, 4
        %s290 = scalar_lea.vmem %s2, %s289
        %s291 = sld [smem:[#allocation3 + %s23]]
        %s292 = sld [smem:[#allocation3 + %s23]]
        %p293 = scmp.lt.s32.totalorder %s292, 2
        %s294 = scalar_select %p293, %s292, 2
        %s295 = smul.addr %s294, 3
        %s296 = smul.addr %s295, 8
        %s297 = scalar_lea.vmem %s3, %s296
        %s298 = sld [smem:[#allocation3 + %s23]]
        %v300 = vld [vmem:[%s290] sm:$0xf]
        %v301 = vld [vmem:[%s290 + $0x4] sm:$0xf]
        %v302 = vld [vmem:[%s290 + $0x8] sm:$0xf]
        %v303 = vld [vmem:[%s253] sm:$0xf]
        %v304 = vld [vmem:[%s253 + $0x4] sm:$0xf]
        %v305 = vld [vmem:[%s253 + $0x8] sm:$0xf]
        %v306 = vld [vmem:[%s253 + $0xc] sm:$0xf]
        %v307 = vld [vmem:[%s253 + $0x10] sm:$0xf]
        %v308 = vld [vmem:[%s253 + $0x14] sm:$0xf]
        %v309 = vld [vmem:[%s253 + $0x18] sm:$0xf]
        %v310 = vld [vmem:[%s253 + $0x1c] sm:$0xf]
        %v311 = vld [vmem:[%s297] sm:$0xff]
        %v312 = vld [vmem:[%s297 + $0x8] sm:$0xff]
        %v313 = vld [vmem:[%s297 + $0x10] sm:$0xff]
        %315 = vset.pattern.permute.xlu0 0
        %316 = vperm.xlu0 %315, %v311
        %v317 = vpop.permute.xlu0 %316
        %320 = vset.pattern.permute.xlu0 0
        %321 = vperm.xlu0 %320, %v312
        %v322 = vpop.permute.xlu0 %321
        %325 = vset.pattern.permute.xlu0 0
        %326 = vperm.xlu0 %325, %v313
        %v327 = vpop.permute.xlu0 %326
        %v332 = vunpack.c.l.b16 %v300
        %v333 = vunpack.c.l.b16 %v301
        %v334 = vunpack.c.l.b16 %v302
        %v335 = vpack.c.b16 %v333, %v332
        %v336 = vpack.c.b16 %v334, %v334
        %v345 = vunpack.c.l.b16 %v303
        %v346 = vunpack.c.l.b16 %v304
        %v347 = vunpack.c.l.b16 %v305
        %v348 = vunpack.c.l.b16 %v306
        %v349 = vunpack.c.l.b16 %v307
        %v350 = vunpack.c.l.b16 %v308
        %v351 = vunpack.c.l.b16 %v309
        %v352 = vunpack.c.l.b16 %v310
        %v353 = vpack.c.b16 %v346, %v345
        %v354 = vpack.c.b16 %v348, %v347
        %v355 = vpack.c.b16 %v350, %v349
        %v356 = vpack.c.b16 %v352, %v351
        %vm361 = vcmask 523264
        %v363 = vsel %vm361, %v335, 0
        %v366 = vsel %vm361, %v336, 0
        %368 = vmatpush.bf16.msra.mxu0 0
        %369 = vmatpush.bf16.msra.mxu0 0
        %370 = vmatpush.bf16.msra.mxu0 0
        %371 = vmatpush.bf16.msra.mxu0 0
        %372 = vmatpush.bf16.msra.mxu0 %v356
        %373 = vmatpush.bf16.msra.mxu0 %v355
        %374 = vmatpush.bf16.msra.mxu0 %v354
        %375 = vmatpush.bf16.msra.mxu0 %v353
        %376 = vmatmul.bf16.gmra.mxu0 %v363
        %v377 = vpop.f32.mrf.mxu0
        %v378 = vadd.f32 %v317, %v377
        %v379 = vpop.f32.mrf.mxu0
        %v380 = vadd.f32 %v322, %v379
        %381 = vmatmul.bf16.gmra.mxu0 %v366
        %v382 = vpop.f32.mrf.mxu0
        %v383 = vadd.f32 %v327, %v382
        %v384 = vpop.f32.mrf.mxu0
        %385 = vdwg.mxu0
        %386 = vst [vmem:[%s284] sm:$0xff] %v378
        %387 = vst [vmem:[%s284 + $0x8] sm:$0xff] %v380
        %388 = vst [vmem:[%s284 + $0x10] sm:$0xff] %v383
        %s389 = sand.u32 %s113, 1
        %s390 = sand.u32 %s113, 1
        %s391 = smul.addr %s390, 24
        %s392 = scalar_lea.vmem [#allocation5], %s391
        // Predicated region
        $region74: #{a_call__.1} parent=68 // pred_check
          %p393 = pneg %p123
        $region75: #{a_call__.1} parent=68 // pred_check_branch
          %395 = sbr.rel (%p393) target = $region77
        $region76: #{a_call__.1} parent=68 // pred_region
          %s396 = smul.addr %s23, 8
          %s397 = scalar_lea.vmem %s4, %s396
          // Predicated region
          $region78: #{a_call__.1} parent=76 // pred_check
            _
          $region79: #{a_call__.1} parent=76 // pred_check_branch
            %399 = sbr.rel (0) target = $region81
          $region80: #{a_call__.1} parent=76 // pred_region
            // Predicated region
            $region82: #{a_call__.1} parent=80 // pred_check
              _
            $region83: #{a_call__.1} parent=80 // pred_check_branch
              %401 = sbr.rel (0) target = $region85
            $region84: #{a_call__.1} parent=80 // pred_region
              // Predicated region
              $region97: #{a_call__.1} parent=84 // pred_check
                _
              $region98: #{a_call__.1} parent=84 // pred_check_branch
                %421 = sbr.rel (0) target = $region100
              $region99: #{a_call__.1} parent=84 // pred_region
                loop: start=0, step=1, limit=1
                $region101: #{a_call__.1} parent=99 // loop_pre_header
                  _
                $region102: #{a_call__.1} parent=99 // loop_header
                  %s423 = sphi 0, %s427
                  %p424 = scmp.ge.s32.totalorder %s423, 1
                  %s428 = sphi %s392, %s392
                  %s429 = sphi %s397, %s397
                $region103: #{a_call__.1} parent=99 // loop_header_branch
                  %426 = sbr.rel (%p424) target = $region107
                $region104: #{a_call__.1} parent=99 // loop_body
                  %v430 = vld [vmem:[%s428] sm:$0xff]
                  %431 = vst [vmem:[%s429] sm:$0xff] %v430
                  %v432 = vld [vmem:[%s428 + $0x8] sm:$0xff]
                  %433 = vst [vmem:[%s429 + $0x18] sm:$0xff] %v432
                  %v434 = vld [vmem:[%s428 + $0x10] sm:$0xff]
                  %435 = vst [vmem:[%s429 + $0x30] sm:$0xff] %v434
                $region105: #{a_call__.1} parent=99 // loop_footer
                  %s427 = sadd.s32 1, %s423
                $region106: #{a_call__.1} parent=99 // loop_footer_branch
                  %422 = sbr.rel target = $region102
                $region107: #{a_call__.1} parent=99 // loop_exit
                  _
              $region100: #{a_call__.1} parent=84 // pred_fallthru
                _
              // Predicated region
              $region108: #{a_call__.1} parent=84 // pred_check
                _
              $region109: #{a_call__.1} parent=84 // pred_check_branch
                %437 = sbr.rel target = $region111
              $region110: #{a_call__.1} parent=84 // pred_region
                _
              $region111: #{a_call__.1} parent=84 // pred_fallthru
                _
            $region85: #{a_call__.1} parent=80 // pred_fallthru
              _
            // Predicated region
            $region86: #{a_call__.1} parent=80 // pred_check
              _
            $region87: #{a_call__.1} parent=80 // pred_check_branch
              %403 = sbr.rel target = $region89
            $region88: #{a_call__.1} parent=80 // pred_region
              %s405 = ssub.s32 256, 1
              loop: start=0, step=1, limit=1
              $region90: #{a_call__.1} parent=88 // loop_pre_header
                _
              $region91: #{a_call__.1} parent=88 // loop_header
                %s407 = sphi 0, %s411
                %p408 = scmp.ge.s32.totalorder %s407, 1
                %s412 = sphi %s392, %s392
                %s413 = sphi %s397, %s397
              $region92: #{a_call__.1} parent=88 // loop_header_branch
                %410 = sbr.rel (%p408) target = $region96
              $region93: #{a_call__.1} parent=88 // loop_body
                %v414 = vld [vmem:[%s412] sm:%s405]
                %415 = vst [vmem:[%s413] sm:%s405] %v414
                %v416 = vld [vmem:[%s412 + $0x8] sm:%s405]
                %417 = vst [vmem:[%s413 + $0x18] sm:%s405] %v416
                %v418 = vld [vmem:[%s412 + $0x10] sm:%s405]
                %419 = vst [vmem:[%s413 + $0x30] sm:%s405] %v418
              $region94: #{a_call__.1} parent=88 // loop_footer
                %s411 = sadd.s32 1, %s407
              $region95: #{a_call__.1} parent=88 // loop_footer_branch
                %406 = sbr.rel target = $region91
              $region96: #{a_call__.1} parent=88 // loop_exit
                _
            $region89: #{a_call__.1} parent=80 // pred_fallthru
              _
          $region81: #{a_call__.1} parent=76 // pred_fallthru
            _
          %438 = vnop
        $region77: #{a_call__.1} parent=68 // pred_fallthru
          _
      $region69: #{a_call__.1} parent=5 // pred_fallthru
        _
      %p439 = scmp.le.s32.totalorder 2, %s18
      // Predicated region
      $region112: #{a_call__.1} parent=5 // pred_check
        %p440 = pneg %p439
      $region113: #{a_call__.1} parent=5 // pred_check_branch
        %442 = sbr.rel (%p440) target = $region115
      $region114: #{a_call__.1} parent=5 // pred_region
        %s443 = ssub.s32 %s18, 2
        // Predicated region
        $region116: #{a_call__.1} parent=114 // pred_check
          %p444 = pneg %p129
        $region117: #{a_call__.1} parent=114 // pred_check_branch
          %446 = sbr.rel (%p444) target = $region119
        $region118: #{a_call__.1} parent=114 // pred_region
          %s447 = sand.u32 %s114, 1
          %s448 = sand.u32 %s114, 1
          %s449 = smul.addr %s448, 24
          %s450 = scalar_lea.vmem [#allocation5], %s449
        $region119: #{a_call__.1} parent=114 // pred_fallthru
          _
      $region115: #{a_call__.1} parent=5 // pred_fallthru
        _
    $region6: #{a_call__.1} parent=1 // loop_footer
      %s22 = sadd.s32 1, %s18
    $region7: #{a_call__.1} parent=1 // loop_footer_branch
      %17 = sbr.rel target = $region3
    $region8: #{a_call__.1} parent=1 // loop_exit
      _

</llo_original>
